<compile_context>
chip_gen: v7x
topology: tpu7x:2x2x1
jax: 0.10.0
libtpu: 0.0.40
codegen_flags: <defaults>
</compile_context>

<pallas_src>
import math

import jax
import jax.numpy as jnp
from jax.experimental import pallas as pl
from jax.experimental.pallas import tpu as pltpu


def _round_up(x, m):
    return -(-x // m) * m


def _sublane_multiple(dtype):
    # Min sublane tile for the second-to-last dim by element width.
    return {4: 8, 2: 16, 1: 32}.get(jnp.dtype(dtype).itemsize, 8)


def _device_kind():
    try:
        return jax.devices()[0].device_kind.lower()
    except Exception:
        return ""


def _make_dice_kernel(r_rows, tk, steps_per_split, sub, needs_mask):
    def kernel(t_ref, l_ref, inter_ref, denom_ref):
        c = pl.program_id(0)
        k = pl.program_id(1)

        @pl.when(k == 0)
        def _():
            inter_ref[...] = jnp.zeros_like(inter_ref)
            denom_ref[...] = jnp.zeros_like(denom_ref)

        def accumulate(valid):
            # Cast AFTER the (native-dtype) tile is already in VMEM.
            t = t_ref[...].astype(jnp.float32)
            pred = l_ref[...] >= 0.5            # binarized logits as predicate
            if valid is not None:
                # Zero BOTH sums' contributions for out-of-range rows.
                pred = jnp.logical_and(pred, valid)
                t = jnp.where(valid, t, 0.0)
            # binarized * targets == where(pred, t, 0)
            # binarized + targets == where(pred, t + 1, t)
            inter_part = jnp.where(pred, t, 0.0)
            denom_part = jnp.where(pred, t + 1.0, t)
            b = inter_part.shape[0]
            if sub == 8:
                # VALU-only partial reduce: fold groups of 8 sublanes; defer
                # the cross-sublane (XLU) reduce to the tiny wrapper epilogue.
                inter_red = inter_part.reshape(b, tk // 8, 8, 128).sum(axis=1)
                denom_red = denom_part.reshape(b, tk // 8, 8, 128).sum(axis=1)
            else:
                inter_red = inter_part.sum(axis=1, keepdims=True)
                denom_red = denom_part.sum(axis=1, keepdims=True)
            inter_ref[...] += inter_red[None]
            denom_ref[...] += denom_red[None]

        if not needs_mask:
            # r divides evenly into the grid: only the fast path is emitted.
            accumulate(None)
        else:
            first_row = (c * steps_per_split + k) * tk
            is_full = first_row + tk <= r_rows

            @pl.when(is_full)
            def _():
                accumulate(None)

            @pl.when(jnp.logical_not(is_full))
            def _():
                rows_left = r_rows - first_row          # may be <= 0
                row_ids = jax.lax.broadcasted_iota(jnp.int32, (tk, 128), 0)
                accumulate(row_ids < rows_left)

    return kernel


def dice_coefficient(targets, logits, epsilon=1e-5):
    """targets, logits: (B, ...) arrays. Returns scalar f32 dice score."""
    b = targets.shape[0]
    # Pure-metadata reshapes: no HBM copy, no wrapper-side dtype cast.
    t2 = targets.reshape(b, -1)
    l2 = logits.reshape(b, -1)
    n = t2.shape[1]

    if n % 128 != 0:
        # TODO(synk): lane-ragged N takes a one-off pad (full copy); an
        # in-kernel lane mask on a flat (B, N) layout would avoid it at the
        # cost of sublane under-occupancy for small B. Zero padding is exact
        # here (logit 0 < 0.5 -> binarized 0; target 0 -> contributes 0).
        pad = 128 - n % 128
        t2 = jnp.pad(t2, ((0, 0), (0, pad)))
        l2 = jnp.pad(l2, ((0, 0), (0, pad)))
    r = t2.shape[1] // 128
    t3 = t2.reshape(b, r, 128)
    l3 = l2.reshape(b, r, 128)

    kind = _device_kind()
    is_v7x = ("7x" in kind) or ("v7" in kind)
    two_tc = is_v7x or ("v4" in kind) or ("v5p" in kind)

    # tk = rows-of-128-lanes per pipelined block. Respect dtype min-tiles and
    # target ~2 MiB of data per input block (4 MiB on v7x, where faster HBM
    # makes the ~0.35 us per-step overhead a bigger fraction).
    align = 8
    for d in (t3.dtype, l3.dtype):
        m = _sublane_multiple(d)
        align = align * m // math.gcd(align, m)
    target_block_bytes = (4 << 20) if is_v7x else (2 << 20)
    bytes_per_row = b * 128 * max(t3.dtype.itemsize, l3.dtype.itemsize)
    tk = max(align, (target_block_bytes // max(1, bytes_per_row)) // align * align)
    tk = min(tk, _round_up(r, align))

    n_tiles = pl.cdiv(r, tk)
    # Split the reduction across two TensorCores only when they exist.
    # (If plain "parallel" does not shard on a given part, pltpu.CORE_PARALLEL
    # on this axis is the fallback knob.)
    splits = 2 if (two_tc and n_tiles >= 8) else 1
    steps_per_split = pl.cdiv(n_tiles, splits)
    needs_mask = splits * steps_per_split * tk > r

    # Accumulator sublane depth: 8 sublanes/batch (VALU-only per-step reduce)
    # unless B is large enough that the accumulators themselves eat VMEM.
    sub = 8 if b <= 256 else 1

    last_block = n_tiles - 1

    def in_index(c, k):
        # Clamp so overshooting steps (ragged split) re-read an in-bounds
        # block; their contribution is masked to zero inside the kernel.
        return (0, jnp.minimum(c * steps_per_split + k, last_block), 0)

    in_spec = pl.BlockSpec((b, tk, 128), in_index)
    out_spec = pl.BlockSpec((1, b, sub, 128), lambda c, k: (c, 0, 0, 0))

    # VMEM budget: 2 inputs x 2 pipeline buffers x block + accumulators.
    blk_bytes = sum(b * _round_up(tk, _sublane_multiple(d)) * 128 * d.itemsize
                    for d in (t3.dtype, l3.dtype))
    acc_bytes = 2 * 2 * b * sub * 128 * 4
    vmem_est = 2 * blk_bytes + acc_bytes + (2 << 20)
    vmem_limit = int(min(max(32 << 20, 2 * vmem_est), 48 << 20))
    # TODO(synk): for extremely large B even tk=align exceeds this cap; that
    # case needs an extra grid axis over B.

    n_elems = b * r * 128
    cost = pl.CostEstimate(
        flops=5 * n_elems,
        transcendentals=0,
        bytes_accessed=n_elems * (t3.dtype.itemsize + l3.dtype.itemsize)
        + 2 * splits * b * sub * 128 * 4,
    )

    kernel = _make_dice_kernel(r, tk, steps_per_split, sub, needs_mask)

    inter_lanes, denom_lanes = pl.pallas_call(
        kernel,
        out_shape=(jax.ShapeDtypeStruct((splits, b, sub, 128), jnp.float32),
                   jax.ShapeDtypeStruct((splits, b, sub, 128), jnp.float32)),
        grid=(splits, steps_per_split),
        in_specs=[in_spec, in_spec],
        out_specs=(out_spec, out_spec),
        compiler_params=pltpu.CompilerParams(
            dimension_semantics=("parallel", "arbitrary"),
            vmem_limit_bytes=vmem_limit),
        cost_estimate=cost,
    )(t3, l3)

    # Tiny epilogue: combine splits + cross-sublane/lane reduce + dice + mean.
    intersection = inter_lanes.sum(axis=(0, 2, 3))   # (B,)
    denom = denom_lanes.sum(axis=(0, 2, 3))          # (B,)
    dice_score = (2.0 * intersection + epsilon) / (denom + epsilon)
    return jnp.mean(dice_score)


if __name__ == "__main__":
    key = jax.random.PRNGKey(0)
    k1, k2 = jax.random.split(key)
    B, C, H, W = 2, 4, 16, 16

    # targets: binary masks; logits: probabilities in [0, 1)
    targets = (jax.random.uniform(k1, (B, C, H, W)) > 0.5).astype(jnp.float32)
    logits = jax.random.uniform(k2, (B, C, H, W)).astype(jnp.float32)

    result = dice_coefficient(targets, logits)
    jax.block_until_ready(result)

    # sanity check against pure-JAX reference (same math as the PyTorch module)
    bin_l = jnp.where(logits >= 0.5, 1.0, 0.0).reshape(B, -1)
    t = targets.reshape(B, -1)
    ref = jnp.mean((2.0 * (bin_l * t).sum(-1) + 1e-5) /
                   ((bin_l + t).sum(-1) + 1e-5))
    assert jnp.allclose(result, ref, atol=1e-5, rtol=1e-5), (result, ref)

    print("KERNEL_OK")
</pallas_src>

<mosaic_0001>
module attributes {stable_mosaic.version = 11 : i64} {
  func.func @kernel(%arg0: i32, %arg1: i32, %arg2: memref<2x8x128xf32, #tpu.memory_space<vmem>>, %arg3: memref<2x8x128xf32, #tpu.memory_space<vmem>>, %arg4: memref<1x2x8x128xf32, #tpu.memory_space<vmem>>, %arg5: memref<1x2x8x128xf32, #tpu.memory_space<vmem>>) attributes {dimension_semantics = [#tpu.dimension_semantics<parallel>, #tpu.dimension_semantics<arbitrary>], iteration_bounds = array<i64: 1, 1>, scalar_prefetch = 0 : i64, scratch_operands = 0 : i64, tpu.core_type = #tpu.core_type<tc>, window_params = [{transform_indices = @transform_0, window_bounds = array<i64: 2, 8, 128>}, {transform_indices = @transform_1, window_bounds = array<i64: 2, 8, 128>}, {transform_indices = @transform_2, window_bounds = array<i64: 1, 2, 8, 128>}, {transform_indices = @transform_3, window_bounds = array<i64: 1, 2, 8, 128>}]} {
    %c0_i32 = arith.constant 0 : i32
    %0 = arith.cmpi eq, %arg1, %c0_i32 : i32
    %1 = arith.extui %0 : i1 to i32
    %c0_i32_0 = arith.constant 0 : i32
    %2 = arith.cmpi ne, %1, %c0_i32_0 : i32
    scf.if %2 {
      %cst_26 = arith.constant 0.000000e+00 : f32
      %24 = vector.broadcast %cst_26 : f32 to vector<1x2x8x128xf32>
      %c0_27 = arith.constant 0 : index
      %c0_28 = arith.constant 0 : index
      %c0_29 = arith.constant 0 : index
      %c0_30 = arith.constant 0 : index
      %25 = vector.load %arg4[%c0_27, %c0_28, %c0_29, %c0_30] : memref<1x2x8x128xf32, #tpu.memory_space<vmem>>, vector<1x2x8x128xf32>
      tpu.vector_store %arg4[%c0_27, %c0_28, %c0_29, %c0_30], %24 {strides = array<i32>} : memref<1x2x8x128xf32, #tpu.memory_space<vmem>>, vector<1x2x8x128xf32>,
      %cst_31 = arith.constant 0.000000e+00 : f32
      %26 = vector.broadcast %cst_31 : f32 to vector<1x2x8x128xf32>
      %c0_32 = arith.constant 0 : index
      %c0_33 = arith.constant 0 : index
      %c0_34 = arith.constant 0 : index
      %c0_35 = arith.constant 0 : index
      %27 = vector.load %arg5[%c0_32, %c0_33, %c0_34, %c0_35] : memref<1x2x8x128xf32, #tpu.memory_space<vmem>>, vector<1x2x8x128xf32>
      tpu.vector_store %arg5[%c0_32, %c0_33, %c0_34, %c0_35], %26 {strides = array<i32>} : memref<1x2x8x128xf32, #tpu.memory_space<vmem>>, vector<1x2x8x128xf32>,
    } else {
    }
    %c0 = arith.constant 0 : index
    %c0_1 = arith.constant 0 : index
    %c0_2 = arith.constant 0 : index
    %3 = vector.load %arg2[%c0, %c0_1, %c0_2] : memref<2x8x128xf32, #tpu.memory_space<vmem>>, vector<2x8x128xf32>
    %c0_3 = arith.constant 0 : index
    %c0_4 = arith.constant 0 : index
    %c0_5 = arith.constant 0 : index
    %4 = vector.load %arg3[%c0_3, %c0_4, %c0_5] : memref<2x8x128xf32, #tpu.memory_space<vmem>>, vector<2x8x128xf32>
    %cst = arith.constant 5.000000e-01 : f32
    %5 = vector.broadcast %cst : f32 to vector<2x8x128xf32>
    %6 = arith.cmpf oge, %4, %5 : vector<2x8x128xf32>
    %cst_6 = arith.constant 0.000000e+00 : f32
    %7 = vector.broadcast %cst_6 : f32 to vector<2x8x128xf32>
    %8 = arith.select %6, %3, %7 : vector<2x8x128xi1>, vector<2x8x128xf32>
    %cst_7 = arith.constant 1.000000e+00 : f32
    %9 = vector.broadcast %cst_7 : f32 to vector<2x8x128xf32>
    %10 = arith.addf %3, %9 : vector<2x8x128xf32>
    %11 = arith.select %6, %10, %3 : vector<2x8x128xi1>, vector<2x8x128xf32>
    %12 = vector.shape_cast %8 : vector<2x8x128xf32> to vector<2x1x8x128xf32>
    %cst_8 = arith.constant dense<0.000000e+00> : vector<2x8x128xf32>
    %13 = vector.multi_reduction <add>, %12, %cst_8 [1] : vector<2x1x8x128xf32> to vector<2x8x128xf32>
    %14 = vector.shape_cast %11 : vector<2x8x128xf32> to vector<2x1x8x128xf32>
    %cst_9 = arith.constant dense<0.000000e+00> : vector<2x8x128xf32>
    %15 = vector.multi_reduction <add>, %14, %cst_9 [1] : vector<2x1x8x128xf32> to vector<2x8x128xf32>
    %c0_10 = arith.constant 0 : index
    %c0_11 = arith.constant 0 : index
    %c0_12 = arith.constant 0 : index
    %c0_13 = arith.constant 0 : index
    %16 = vector.load %arg4[%c0_10, %c0_11, %c0_12, %c0_13] : memref<1x2x8x128xf32, #tpu.memory_space<vmem>>, vector<1x2x8x128xf32>
    %17 = vector.shape_cast %13 : vector<2x8x128xf32> to vector<1x2x8x128xf32>
    %18 = arith.addf %16, %17 : vector<1x2x8x128xf32>
    %c0_14 = arith.constant 0 : index
    %c0_15 = arith.constant 0 : index
    %c0_16 = arith.constant 0 : index
    %c0_17 = arith.constant 0 : index
    %19 = vector.load %arg4[%c0_14, %c0_15, %c0_16, %c0_17] : memref<1x2x8x128xf32, #tpu.memory_space<vmem>>, vector<1x2x8x128xf32>
    tpu.vector_store %arg4[%c0_14, %c0_15, %c0_16, %c0_17], %18 {strides = array<i32>} : memref<1x2x8x128xf32, #tpu.memory_space<vmem>>, vector<1x2x8x128xf32>,
    %c0_18 = arith.constant 0 : index
    %c0_19 = arith.constant 0 : index
    %c0_20 = arith.constant 0 : index
    %c0_21 = arith.constant 0 : index
    %20 = vector.load %arg5[%c0_18, %c0_19, %c0_20, %c0_21] : memref<1x2x8x128xf32, #tpu.memory_space<vmem>>, vector<1x2x8x128xf32>
    %21 = vector.shape_cast %15 : vector<2x8x128xf32> to vector<1x2x8x128xf32>
    %22 = arith.addf %20, %21 : vector<1x2x8x128xf32>
    %c0_22 = arith.constant 0 : index
    %c0_23 = arith.constant 0 : index
    %c0_24 = arith.constant 0 : index
    %c0_25 = arith.constant 0 : index
    %23 = vector.load %arg5[%c0_22, %c0_23, %c0_24, %c0_25] : memref<1x2x8x128xf32, #tpu.memory_space<vmem>>, vector<1x2x8x128xf32>
    tpu.vector_store %arg5[%c0_22, %c0_23, %c0_24, %c0_25], %22 {strides = array<i32>} : memref<1x2x8x128xf32, #tpu.memory_space<vmem>>, vector<1x2x8x128xf32>,
    return
  }
  func.func @transform_0(%arg0: i32, %arg1: i32) -> (i32, i32, i32) {
    %c1_i32 = arith.constant 1 : i32
    %0 = arith.muli %arg0, %c1_i32 : i32
    %1 = arith.addi %0, %arg1 : i32
    %c0_i32 = arith.constant 0 : i32
    %2 = arith.minsi %1, %c0_i32 : i32
    %c0_i32_0 = arith.constant 0 : i32
    %c0_i32_1 = arith.constant 0 : i32
    %c0_i32_2 = arith.constant 0 : i32
    return %c0_i32_0, %2, %c0_i32_1 : i32, i32, i32
  }
  func.func @transform_1(%arg0: i32, %arg1: i32) -> (i32, i32, i32) {
    %c1_i32 = arith.constant 1 : i32
    %0 = arith.muli %arg0, %c1_i32 : i32
    %1 = arith.addi %0, %arg1 : i32
    %c0_i32 = arith.constant 0 : i32
    %2 = arith.minsi %1, %c0_i32 : i32
    %c0_i32_0 = arith.constant 0 : i32
    %c0_i32_1 = arith.constant 0 : i32
    %c0_i32_2 = arith.constant 0 : i32
    return %c0_i32_0, %2, %c0_i32_1 : i32, i32, i32
  }
  func.func @transform_2(%arg0: i32, %arg1: i32) -> (i32, i32, i32, i32) {
    %c0_i32 = arith.constant 0 : i32
    %c0_i32_0 = arith.constant 0 : i32
    %c0_i32_1 = arith.constant 0 : i32
    %c0_i32_2 = arith.constant 0 : i32
    return %arg0, %c0_i32, %c0_i32_0, %c0_i32_1 : i32, i32, i32, i32
  }
  func.func @transform_3(%arg0: i32, %arg1: i32) -> (i32, i32, i32, i32) {
    %c0_i32 = arith.constant 0 : i32
    %c0_i32_0 = arith.constant 0 : i32
    %c0_i32_1 = arith.constant 0 : i32
    %c0_i32_2 = arith.constant 0 : i32
    return %arg0, %c0_i32, %c0_i32_0, %c0_i32_1 : i32, i32, i32, i32
  }
}

</mosaic_0001>

<llo_original>
// kernel: tpu_custom_call.1
$region0: #{tpu_custom_call.1}
  #allocation0 [shape = 'u32[]', space=smem, size = 0x4, offset = 0x4, fixed_abs, tag = 'smem constant byte address 0x4 - core index']
  #allocation1 [shape = 'u32[144,128]{1,0:T(1,128)}', space=vmem, size = 0x12000, scoped, tag = 'internal scratch']
  %s0 = inlined_call_operand.hbm [shape: f32[2,8,128], index: 0, kind: input, shape index: {}]
  %s1 = inlined_call_operand.hbm [shape: f32[2,8,128], index: 1, kind: input, shape index: {}]
  %s2 = inlined_call_operand.hbm [shape: f32[1,2,8,128], index: 2, kind: output, shape index: {0}]
  %s3 = inlined_call_operand.hbm [shape: f32[1,2,8,128], index: 3, kind: output, shape index: {1}]
  %4 = xla_tuple %s2, %s3
  %s5 = sld [smem:[#allocation0]]
  $region38: #{tpu_custom_call.1} parent=0
    _
  %s7 = ssub.s32 1, %s5
  %s8 = scalar_select 0, %s7, %s5
  $region1: #{tpu_custom_call.1} parent=0
    #allocation2 [shape = 'u8[8192]{0}', space=vmem, size = 0x2000, scoped, tag = 'input window, operand 0, single buffered']
    #allocation3 [shape = 's32[1]{0}', space=sflag, size = 0x4, scoped, tag = 'scoped memory for tpu_custom_call.1']
    #allocation4 [shape = 's32[1]{0}', space=sflag, size = 0x4, scoped, tag = 'scoped memory for tpu_custom_call.1']
    #allocation5 [shape = 'u8[8192]{0}', space=vmem, size = 0x2000, scoped, tag = 'input window, operand 1, single buffered']
    #allocation6 [shape = 's32[1]{0}', space=sflag, size = 0x4, scoped, tag = 'scoped memory for tpu_custom_call.1']
    #allocation7 [shape = 'u8[8192]{0}', space=vmem, size = 0x2000, scoped, tag = 'output window, operand 0, single buffered']
    #allocation8 [shape = 'u8[8192]{0}', space=vmem, size = 0x2000, scoped, tag = 'output window, operand 1, single buffered']
    #allocation9 [shape = 's32[1]{0}', space=sflag, size = 0x4, scoped, tag = 'scoped memory for tpu_custom_call.1']
    %9 = vsyncpa [#allocation3], 0
    %10 = vsyncpa [#allocation6], 0
    %11 = vsyncpa [#allocation4], 0
    %12 = vsyncpa [#allocation9], 0
    // Predicated region
    $region2: #{tpu_custom_call.1} parent=1 // pred_check
      _
    $region3: #{tpu_custom_call.1} parent=1 // pred_check_branch
      %14 = sbr.rel (0) target = $region5
    $region4: #{tpu_custom_call.1} parent=1 // pred_region
      %s15 = sadd.s32 0, 0
      %p16 = scmp.lt.s32.totalorder %s15, 0
      %s17 = scalar_select %p16, %s15, 0
      %s19 = ssub.s32 256, 256
      %20 = vsyncadd [#allocation3], %s19
      %s21 = smul.addr %s17, 128
      %s22 = scalar_lea.hbm %s0, %s21
      %s23 = sshll.u32 [#allocation2], 4
      %s24 = int_to_ptr.vmem [resolvable:$true] %s23
      %29 = dma.hbm_to_vmem [thread:$0]  %s22, 256, %s24, [#allocation3], 128, 128, 8
    $region5: #{tpu_custom_call.1} parent=1 // pred_fallthru
      _
    // Predicated region
    $region6: #{tpu_custom_call.1} parent=1 // pred_check
      _
    $region7: #{tpu_custom_call.1} parent=1 // pred_check_branch
      %31 = sbr.rel (0) target = $region9
    $region8: #{tpu_custom_call.1} parent=1 // pred_region
      %s32 = sadd.s32 0, 0
      %p33 = scmp.lt.s32.totalorder %s32, 0
      %s34 = scalar_select %p33, %s32, 0
      %s36 = ssub.s32 256, 256
      %37 = vsyncadd [#allocation6], %s36
      %s38 = smul.addr %s34, 128
      %s39 = scalar_lea.hbm %s1, %s38
      %s40 = sshll.u32 [#allocation5], 4
      %s41 = int_to_ptr.vmem [resolvable:$true] %s40
      %46 = dma.hbm_to_vmem [thread:$0]  %s39, 256, %s41, [#allocation6], 128, 128, 8
    $region9: #{tpu_custom_call.1} parent=1 // pred_fallthru
      _
    // Predicated region
    $region10: #{tpu_custom_call.1} parent=1 // pred_check
      _
    $region11: #{tpu_custom_call.1} parent=1 // pred_check_branch
      %48 = sbr.rel (0) target = $region13
    $region12: #{tpu_custom_call.1} parent=1 // pred_region
      %49 = dma.done [#allocation3], 256
    $region13: #{tpu_custom_call.1} parent=1 // pred_fallthru
      _
    // Predicated region
    $region14: #{tpu_custom_call.1} parent=1 // pred_check
      _
    $region15: #{tpu_custom_call.1} parent=1 // pred_check_branch
      %51 = sbr.rel (0) target = $region17
    $region16: #{tpu_custom_call.1} parent=1 // pred_region
      %52 = dma.done [#allocation6], 256
    $region17: #{tpu_custom_call.1} parent=1 // pred_fallthru
      _
    %s53 = sadd.s32 0, 0
    %p54 = scmp.lt.s32.totalorder %s53, 0
    %s55 = scalar_select %p54, %s53, 0
    %s56 = sadd.s32 0, 0
    %p57 = scmp.lt.s32.totalorder %s56, 0
    %s58 = scalar_select %p57, %s56, 0
    %p59 = scmp.eq.s32.totalorder 0, 0
    // Predicated region
    $region18: #{tpu_custom_call.1} parent=1 // pred_check
      %p60 = pneg %p59
    $region19: #{tpu_custom_call.1} parent=1 // pred_check_branch
      %62 = sbr.rel (%p60) target = $region21
    $region20: #{tpu_custom_call.1} parent=1 // pred_region
      %63 = vst [vmem:[#allocation7] sm:$0xff] 0.0
      %64 = vst [vmem:[#allocation7 + $0x8] sm:$0xff] 0.0
      %65 = vst [vmem:[#allocation8] sm:$0xff] 0.0
      %66 = vst [vmem:[#allocation8 + $0x8] sm:$0xff] 0.0
    $region21: #{tpu_custom_call.1} parent=1 // pred_fallthru
      _
    %v67 = vld [vmem:[#allocation2] sm:$0xff]
    %v68 = vld [vmem:[#allocation2 + $0x8] sm:$0xff]
    %v69 = vld [vmem:[#allocation5] sm:$0xff]
    %v70 = vld [vmem:[#allocation5 + $0x8] sm:$0xff]
    %vm71 = vcmp.ge.f32.partialorder %v69, 0.5
    %vm72 = vcmp.ge.f32.partialorder %v70, 0.5
    %v73 = vsel %vm71, %v67, 0.0
    %v74 = vsel %vm72, %v68, 0.0
    %v75 = vadd.f32 %v67, 1.0
    %v76 = vadd.f32 %v68, 1.0
    %v77 = vsel %vm71, %v75, %v67
    %v78 = vsel %vm72, %v76, %v68
    %v79 = vadd.f32 %v73, 0.0
    %v80 = vadd.f32 %v74, 0.0
    %v81 = vadd.f32 %v77, 0.0
    %v82 = vadd.f32 %v78, 0.0
    %v83 = vld [vmem:[#allocation7] sm:$0xff]
    %v84 = vld [vmem:[#allocation7 + $0x8] sm:$0xff]
    %v85 = vadd.f32 %v83, %v79
    %v86 = vadd.f32 %v84, %v80
    %87 = vst [vmem:[#allocation7] sm:$0xff] %v85
    %88 = vst [vmem:[#allocation7 + $0x8] sm:$0xff] %v86
    %v89 = vld [vmem:[#allocation8] sm:$0xff]
    %v90 = vld [vmem:[#allocation8 + $0x8] sm:$0xff]
    %v91 = vadd.f32 %v89, %v81
    %v92 = vadd.f32 %v90, %v82
    %93 = vst [vmem:[#allocation8] sm:$0xff] %v91
    %94 = vst [vmem:[#allocation8 + $0x8] sm:$0xff] %v92
    // Predicated region
    $region22: #{tpu_custom_call.1} parent=1 // pred_check
      _
    $region23: #{tpu_custom_call.1} parent=1 // pred_check_branch
      %96 = sbr.rel (0) target = $region25
    $region24: #{tpu_custom_call.1} parent=1 // pred_region
      %s98 = ssub.s32 256, 256
      %99 = vsyncadd [#allocation4], %s98
      %s100 = sshll.u32 [#allocation7], 4
      %s101 = int_to_ptr.vmem [resolvable:$true] %s100
      %106 = dma.vmem_to_hbm [thread:$0]  %s101, 256, %s2, [#allocation4], 128, 128, 8
    $region25: #{tpu_custom_call.1} parent=1 // pred_fallthru
      _
    // Predicated region
    $region26: #{tpu_custom_call.1} parent=1 // pred_check
      _
    $region27: #{tpu_custom_call.1} parent=1 // pred_check_branch
      %108 = sbr.rel (0) target = $region29
    $region28: #{tpu_custom_call.1} parent=1 // pred_region
      %s110 = ssub.s32 256, 256
      %111 = vsyncadd [#allocation9], %s110
      %s112 = sshll.u32 [#allocation8], 4
      %s113 = int_to_ptr.vmem [resolvable:$true] %s112
      %118 = dma.vmem_to_hbm [thread:$0]  %s113, 256, %s3, [#allocation9], 128, 128, 8
    $region29: #{tpu_custom_call.1} parent=1 // pred_fallthru
      _
    // Predicated region
    $region30: #{tpu_custom_call.1} parent=1 // pred_check
      _
    $region31: #{tpu_custom_call.1} parent=1 // pred_check_branch
      %120 = sbr.rel (0) target = $region33
    $region32: #{tpu_custom_call.1} parent=1 // pred_region
      %121 = dma.done [#allocation4], 256
    $region33: #{tpu_custom_call.1} parent=1 // pred_fallthru
      _
    // Predicated region
    $region34: #{tpu_custom_call.1} parent=1 // pred_check
      _
    $region35: #{tpu_custom_call.1} parent=1 // pred_check_branch
      %123 = sbr.rel (0) target = $region37
    $region36: #{tpu_custom_call.1} parent=1 // pred_region
      %124 = dma.done [#allocation9], 256
    $region37: #{tpu_custom_call.1} parent=1 // pred_fallthru
      _
    %125 = vsyncpa [#allocation3], 1
    %126 = vsyncpa [#allocation6], 1
    %127 = vsyncpa [#allocation4], 1
    %128 = vsyncpa [#allocation9], 1

</llo_original>
